<compile_context>
chip_gen: v5e
topology: v5e:2x2
jax: 0.10.0
libtpu: 0.0.40
codegen_flags: <defaults>
</compile_context>

<pallas_src>
import jax
import jax.numpy as jnp
from jax.experimental import pallas as pl
from jax.experimental.pallas import tpu as pltpu


def _round_up(x, m):
    return (x + m - 1) // m * m


def _pick_tile(total, desired, mult):
    """Largest tile <= desired that is a multiple of `mult` and divides the
    padded total (total rounded up to `mult`). Returns (tile, padded_total)."""
    padded = _round_up(total, mult)
    tile = max(mult, min(_round_up(desired, mult), padded))
    while padded % tile:
        tile -= mult
    return tile, padded


def _neuron_layer_kernel(x_ref, wk_ref, bk_ref, wc_ref, bc_ref, o_ref, v_ref):
    # Grid = (batch tiles, F_out tiles). F_out is the inner ("arbitrary") axis:
    # the first-layer activation of this batch tile is computed once at j == 0
    # into VMEM scratch and reused for every F_out tile.
    j = pl.program_id(1)

    @pl.when(j == 0)
    def _():
        x = x_ref[...]
        wk = wk_ref[...]
        if x.dtype != wk.dtype:          # static dtype check (bf16 weights)
            x = x.astype(wk.dtype)
        v = jnp.dot(x, wk, preferred_element_type=jnp.float32)
        v_ref[...] = v + bk_ref[...]     # (tile_b, H) + (1, H), f32

    # Connection.forward for this (batch tile, F_out tile).
    wc = wc_ref[...]
    v = v_ref[...]                       # f32 intermediate
    if v.dtype != wc.dtype:
        v = v.astype(wc.dtype)           # bf16 rounding only if weights are bf16
    out = jnp.dot(v, wc, preferred_element_type=jnp.float32) + bc_ref[...]
    o_ref[...] = out.astype(o_ref.dtype)
    # NOTE: if tile_b * H_pad grows very large (f32 intermediate >> vreg file),
    # chunk the second dot over H with lax.fori_loop(unroll=True) to keep
    # spills structured.


def neuron_layer_forward(x, w_kernel, b_kernel, w_conn, b_conn, *,
                         tile_b=256, tile_fo=512):
    """x: (B, F_in), w_kernel: (F_in, H), b_kernel: (H,),
       w_conn: (H, F_out), b_conn: (F_out,)  ->  (B, F_out)"""
    B, F_in = x.shape
    H = w_kernel.shape[1]
    F_out = w_conn.shape[1]
    assert w_kernel.shape[0] == F_in and w_conn.shape[0] == H
    assert b_kernel.shape == (H,) and b_conn.shape == (F_out,)

    # Lane-dense padding: feature dims -> multiples of 128 (unmasked stores),
    # batch -> multiple of an 8-aligned batch tile. Zero padding preserves the
    # exact result on the valid slice (padded rows/cols contribute zeros).
    tile_b, B_p = _pick_tile(B, tile_b, 8)
    tile_fo, F_out_p = _pick_tile(F_out, tile_fo, 128)
    F_in_p = _round_up(F_in, 128)
    H_p = _round_up(H, 128)

    def pad2(a, r, c):
        pr, pc = r - a.shape[0], c - a.shape[1]
        return jnp.pad(a, ((0, pr), (0, pc))) if (pr or pc) else a

    x_p = pad2(x, B_p, F_in_p)
    wk_p = pad2(w_kernel, F_in_p, H_p)
    bk_p = pad2(b_kernel.reshape(1, -1), 1, H_p)
    wc_p = pad2(w_conn, H_p, F_out_p)
    bc_p = pad2(b_conn.reshape(1, -1), 1, F_out_p)

    grid = (B_p // tile_b, F_out_p // tile_fo)

    # VMEM working-set estimate (x / Wc / out tiles double-buffered by the
    # pipeline; grid-invariant Wk / bk single-buffered; + f32 v scratch).
    def isz(a):
        return a.dtype.itemsize

    vmem_est = (
        2 * tile_b * F_in_p * isz(x_p)
        + F_in_p * H_p * isz(wk_p)
        + H_p * isz(bk_p)
        + 2 * H_p * tile_fo * isz(wc_p)
        + 2 * tile_fo * isz(bc_p)
        + 2 * tile_b * tile_fo * isz(x_p)
        + tile_b * H_p * 4
    )
    vmem_limit = int(min(max(vmem_est + (4 << 20), 32 << 20), 48 << 20))

    flops = 2 * B_p * F_in_p * H_p + 2 * B_p * H_p * F_out_p
    bytes_accessed = sum(int(a.size) * isz(a)
                         for a in (x_p, wk_p, bk_p, wc_p, bc_p))
    bytes_accessed += B_p * F_out_p * isz(x_p)

    def build_call(single_buffer_weights):
        if single_buffer_weights:
            wk_spec = pl.BlockSpec((F_in_p, H_p), lambda i, j: (0, 0),
                                   pipeline_mode=pl.Buffered(1))
            bk_spec = pl.BlockSpec((1, H_p), lambda i, j: (0, 0),
                                   pipeline_mode=pl.Buffered(1))
        else:
            wk_spec = pl.BlockSpec((F_in_p, H_p), lambda i, j: (0, 0))
            bk_spec = pl.BlockSpec((1, H_p), lambda i, j: (0, 0))

        return pl.pallas_call(
            _neuron_layer_kernel,
            out_shape=jax.ShapeDtypeStruct((B_p, F_out_p), x.dtype),
            grid_spec=pltpu.PrefetchScalarGridSpec(
                num_scalar_prefetch=0,
                grid=grid,
                in_specs=[
                    pl.BlockSpec((tile_b, F_in_p), lambda i, j: (i, 0)),   # x
                    wk_spec,                                               # W_kernel
                    bk_spec,                                               # b_kernel
                    pl.BlockSpec((H_p, tile_fo), lambda i, j: (0, j)),     # W_conn
                    pl.BlockSpec((1, tile_fo), lambda i, j: (0, j)),       # b_conn
                ],
                out_specs=pl.BlockSpec((tile_b, tile_fo), lambda i, j: (i, j)),
                scratch_shapes=[pltpu.VMEM((tile_b, H_p), jnp.float32)],
            ),
            compiler_params=pltpu.CompilerParams(
                # batch axis parallel (megacore sharding on v7x); F_out axis is
                # sequential because the v scratch is reused across its steps.
                dimension_semantics=("parallel", "arbitrary"),
                vmem_limit_bytes=vmem_limit,
            ),
            cost_estimate=pl.CostEstimate(
                flops=flops, transcendentals=0, bytes_accessed=bytes_accessed),
        )

    try:
        out_p = build_call(True)(x_p, wk_p, bk_p, wc_p, bc_p)
    except Exception:
        # Fallback if this jax build rejects pipeline_mode=pl.Buffered(1):
        # identical semantics, just default (double) buffering of the weights.
        out_p = build_call(False)(x_p, wk_p, bk_p, wc_p, bc_p)

    return out_p[:B, :F_out]


if __name__ == "__main__":
    key = jax.random.PRNGKey(0)
    k_x, k_wk, k_bk, k_wc, k_bc = jax.random.split(key, 5)

    # --- Test 1: lane-dense shapes (features already multiples of 128). ---
    B, F_in, H, F_out = 16, 128, 128, 128
    x = jax.random.normal(k_x, (B, F_in), dtype=jnp.float32)
    w_kernel = jax.random.normal(k_wk, (F_in, H), dtype=jnp.float32) * 0.1
    b_kernel = jax.random.normal(k_bk, (H,), dtype=jnp.float32) * 0.1
    w_conn = jax.random.normal(k_wc, (H, F_out), dtype=jnp.float32) * 0.1
    b_conn = jax.random.normal(k_bc, (F_out,), dtype=jnp.float32) * 0.1

    out = jax.block_until_ready(
        neuron_layer_forward(x, w_kernel, b_kernel, w_conn, b_conn))
    ref = (x @ w_kernel + b_kernel) @ w_conn + b_conn
    assert out.shape == (B, F_out)
    assert jnp.allclose(out, ref, atol=1e-4, rtol=1e-4)

    # --- Test 2: ragged shapes (padding path; no divisibility asserts). ---
    B2, F_in2, H2, F_out2 = 5, 33, 72, 50
    x2 = jax.random.normal(k_x, (B2, F_in2), dtype=jnp.float32)
    wk2 = jax.random.normal(k_wk, (F_in2, H2), dtype=jnp.float32) * 0.1
    bk2 = jax.random.normal(k_bk, (H2,), dtype=jnp.float32) * 0.1
    wc2 = jax.random.normal(k_wc, (H2, F_out2), dtype=jnp.float32) * 0.1
    bc2 = jax.random.normal(k_bc, (F_out2,), dtype=jnp.float32) * 0.1

    out2 = jax.block_until_ready(neuron_layer_forward(x2, wk2, bk2, wc2, bc2))
    ref2 = (x2 @ wk2 + bk2) @ wc2 + bc2
    assert out2.shape == (B2, F_out2)
    assert jnp.allclose(out2, ref2, atol=1e-4, rtol=1e-4)

    # --- Test 3: bf16 weights/activations (v6e/v7x MXU fast path), f32 acc. ---
    out3 = jax.block_until_ready(
        neuron_layer_forward(x.astype(jnp.bfloat16),
                             w_kernel.astype(jnp.bfloat16),
                             b_kernel.astype(jnp.bfloat16),
                             w_conn.astype(jnp.bfloat16),
                             b_conn.astype(jnp.bfloat16)))
    assert out3.shape == (B, F_out)
    assert jnp.allclose(out3.astype(jnp.float32), ref, atol=0.3, rtol=0.1)

    # TODO(synk): NeuronLayer.backward (VJP through connection then kernel) is
    # not kernelized; only the forward hot path is.
    print("KERNEL_OK")
</pallas_src>

<mosaic_0001>
module attributes {stable_mosaic.version = 11 : i64} {
  func.func @_neuron_layer_kernel(%arg0: i32, %arg1: i32, %arg2: memref<16x128xf32, #tpu.memory_space<vmem>>, %arg3: memref<128x128xf32, #tpu.memory_space<vmem>>, %arg4: memref<1x128xf32, #tpu.memory_space<vmem>>, %arg5: memref<128x128xf32, #tpu.memory_space<vmem>>, %arg6: memref<1x128xf32, #tpu.memory_space<vmem>>, %arg7: memref<16x128xf32, #tpu.memory_space<vmem>>, %arg8: memref<16x128xf32, #tpu.memory_space<vmem>>) attributes {dimension_semantics = [#tpu.dimension_semantics<parallel>, #tpu.dimension_semantics<arbitrary>], iteration_bounds = array<i64: 1, 1>, scalar_prefetch = 0 : i64, scratch_operands = 1 : i64, tpu.core_type = #tpu.core_type<tc>, window_params = [{transform_indices = @transform_0, window_bounds = array<i64: 16, 128>}, {pipeline_mode = #tpu.pipeline_mode<synchronous>, transform_indices = @transform_1, window_bounds = array<i64: 128, 128>}, {pipeline_mode = #tpu.pipeline_mode<synchronous>, transform_indices = @transform_2, window_bounds = array<i64: 1, 128>}, {transform_indices = @transform_3, window_bounds = array<i64: 128, 128>}, {transform_indices = @transform_4, window_bounds = array<i64: 1, 128>}, {transform_indices = @transform_5, window_bounds = array<i64: 16, 128>}]} {
    %c0_i32 = arith.constant 0 : i32
    %0 = arith.cmpi eq, %arg1, %c0_i32 : i32
    %1 = arith.extui %0 : i1 to i32
    %c0_i32_0 = arith.constant 0 : i32
    %2 = arith.cmpi ne, %1, %c0_i32_0 : i32
    scf.if %2 {
      %c0_8 = arith.constant 0 : index
      %c0_9 = arith.constant 0 : index
      %10 = vector.load %arg2[%c0_8, %c0_9] : memref<16x128xf32, #tpu.memory_space<vmem>>, vector<16x128xf32>
      %c0_10 = arith.constant 0 : index
      %c0_11 = arith.constant 0 : index
      %11 = vector.load %arg3[%c0_10, %c0_11] : memref<128x128xf32, #tpu.memory_space<vmem>>, vector<128x128xf32>
      %cst_12 = arith.constant dense<0.000000e+00> : vector<16x128xf32>
      %12 = tpu.matmul %10, %11, %cst_12 {dimension_numbers = #tpu.dot_dimension_numbers<[1], [0], [0], [1], [0, 0, 1, 1], [], []>} : vector<16x128xf32>, vector<128x128xf32>, vector<16x128xf32> -> vector<16x128xf32>
      %c0_13 = arith.constant 0 : index
      %c0_14 = arith.constant 0 : index
      %13 = vector.load %arg4[%c0_13, %c0_14] : memref<1x128xf32, #tpu.memory_space<vmem>>, vector<1x128xf32>
      %14 = vector.broadcast %13 : vector<1x128xf32> to vector<16x128xf32>
      %15 = arith.addf %12, %14 : vector<16x128xf32>
      %c0_15 = arith.constant 0 : index
      %c0_16 = arith.constant 0 : index
      %16 = vector.load %arg8[%c0_15, %c0_16] : memref<16x128xf32, #tpu.memory_space<vmem>>, vector<16x128xf32>
      tpu.vector_store %arg8[%c0_15, %c0_16], %15 {strides = array<i32>} : memref<16x128xf32, #tpu.memory_space<vmem>>, vector<16x128xf32>,
    } else {
    }
    %c0 = arith.constant 0 : index
    %c0_1 = arith.constant 0 : index
    %3 = vector.load %arg5[%c0, %c0_1] : memref<128x128xf32, #tpu.memory_space<vmem>>, vector<128x128xf32>
    %c0_2 = arith.constant 0 : index
    %c0_3 = arith.constant 0 : index
    %4 = vector.load %arg8[%c0_2, %c0_3] : memref<16x128xf32, #tpu.memory_space<vmem>>, vector<16x128xf32>
    %cst = arith.constant dense<0.000000e+00> : vector<16x128xf32>
    %5 = tpu.matmul %4, %3, %cst {dimension_numbers = #tpu.dot_dimension_numbers<[1], [0], [0], [1], [0, 0, 1, 1], [], []>} : vector<16x128xf32>, vector<128x128xf32>, vector<16x128xf32> -> vector<16x128xf32>
    %c0_4 = arith.constant 0 : index
    %c0_5 = arith.constant 0 : index
    %6 = vector.load %arg6[%c0_4, %c0_5] : memref<1x128xf32, #tpu.memory_space<vmem>>, vector<1x128xf32>
    %7 = vector.broadcast %6 : vector<1x128xf32> to vector<16x128xf32>
    %8 = arith.addf %5, %7 : vector<16x128xf32>
    %c0_6 = arith.constant 0 : index
    %c0_7 = arith.constant 0 : index
    %9 = vector.load %arg7[%c0_6, %c0_7] : memref<16x128xf32, #tpu.memory_space<vmem>>, vector<16x128xf32>
    tpu.vector_store %arg7[%c0_6, %c0_7], %8 {strides = array<i32>} : memref<16x128xf32, #tpu.memory_space<vmem>>, vector<16x128xf32>,
    return
  }
  func.func @transform_0(%arg0: i32, %arg1: i32) -> (i32, i32) {
    %c0_i32 = arith.constant 0 : i32
    %c0_i32_0 = arith.constant 0 : i32
    return %arg0, %c0_i32 : i32, i32
  }
  func.func @transform_1(%arg0: i32, %arg1: i32) -> (i32, i32) {
    %c0_i32 = arith.constant 0 : i32
    %c0_i32_0 = arith.constant 0 : i32
    %c0_i32_1 = arith.constant 0 : i32
    return %c0_i32, %c0_i32_0 : i32, i32
  }
  func.func @transform_2(%arg0: i32, %arg1: i32) -> (i32, i32) {
    %c0_i32 = arith.constant 0 : i32
    %c0_i32_0 = arith.constant 0 : i32
    %c0_i32_1 = arith.constant 0 : i32
    return %c0_i32, %c0_i32_0 : i32, i32
  }
  func.func @transform_3(%arg0: i32, %arg1: i32) -> (i32, i32) {
    %c0_i32 = arith.constant 0 : i32
    %c0_i32_0 = arith.constant 0 : i32
    return %c0_i32, %arg1 : i32, i32
  }
  func.func @transform_4(%arg0: i32, %arg1: i32) -> (i32, i32) {
    %c0_i32 = arith.constant 0 : i32
    %c0_i32_0 = arith.constant 0 : i32
    return %c0_i32, %arg1 : i32, i32
  }
  func.func @transform_5(%arg0: i32, %arg1: i32) -> (i32, i32) {
    %c0_i32 = arith.constant 0 : i32
    return %arg0, %arg1 : i32, i32
  }
}

module attributes {stable_mosaic.version = 11 : i64} {
  func.func @_neuron_layer_kernel(%arg0: i32, %arg1: i32, %arg2: memref<16x128xf32, #tpu.memory_space<vmem>>, %arg3: memref<128x128xf32, #tpu.memory_space<vmem>>, %arg4: memref<1x128xf32, #tpu.memory_space<vmem>>, %arg5: memref<128x128xf32, #tpu.memory_space<vmem>>, %arg6: memref<1x128xf32, #tpu.memory_space<vmem>>, %arg7: memref<16x128xf32, #tpu.memory_space<vmem>>, %arg8: memref<16x128xf32, #tpu.memory_space<vmem>>) attributes {dimension_semantics = [#tpu.dimension_semantics<parallel>, #tpu.dimension_semantics<arbitrary>], iteration_bounds = array<i64: 1, 1>, scalar_prefetch = 0 : i64, scratch_operands = 1 : i64, tpu.core_type = #tpu.core_type<tc>, window_params = [{transform_indices = @transform_0, window_bounds = array<i64: 16, 128>}, {pipeline_mode = #tpu.pipeline_mode<synchronous>, transform_indices = @transform_1, window_bounds = array<i64: 128, 128>}, {pipeline_mode = #tpu.pipeline_mode<synchronous>, transform_indices = @transform_2, window_bounds = array<i64: 1, 128>}, {transform_indices = @transform_3, window_bounds = array<i64: 128, 128>}, {transform_indices = @transform_4, window_bounds = array<i64: 1, 128>}, {transform_indices = @transform_5, window_bounds = array<i64: 16, 128>}]} {
    %c0_i32 = arith.constant 0 : i32
    %0 = arith.cmpi eq, %arg1, %c0_i32 : i32
    %1 = arith.extui %0 : i1 to i32
    %c0_i32_0 = arith.constant 0 : i32
    %2 = arith.cmpi ne, %1, %c0_i32_0 : i32
    scf.if %2 {
      %c0_8 = arith.constant 0 : index
      %c0_9 = arith.constant 0 : index
      %10 = vector.load %arg2[%c0_8, %c0_9] : memref<16x128xf32, #tpu.memory_space<vmem>>, vector<16x128xf32>
      %c0_10 = arith.constant 0 : index
      %c0_11 = arith.constant 0 : index
      %11 = vector.load %arg3[%c0_10, %c0_11] : memref<128x128xf32, #tpu.memory_space<vmem>>, vector<128x128xf32>
      %cst_12 = arith.constant dense<0.000000e+00> : vector<16x128xf32>
      %12 = tpu.matmul %10, %11, %cst_12 {dimension_numbers = #tpu.dot_dimension_numbers<[1], [0], [0], [1], [0, 0, 1, 1], [], []>} : vector<16x128xf32>, vector<128x128xf32>, vector<16x128xf32> -> vector<16x128xf32>
      %c0_13 = arith.constant 0 : index
      %c0_14 = arith.constant 0 : index
      %13 = vector.load %arg4[%c0_13, %c0_14] : memref<1x128xf32, #tpu.memory_space<vmem>>, vector<1x128xf32>
      %14 = vector.broadcast %13 : vector<1x128xf32> to vector<16x128xf32>
      %15 = arith.addf %12, %14 : vector<16x128xf32>
      %c0_15 = arith.constant 0 : index
      %c0_16 = arith.constant 0 : index
      %16 = vector.load %arg8[%c0_15, %c0_16] : memref<16x128xf32, #tpu.memory_space<vmem>>, vector<16x128xf32>
      tpu.vector_store %arg8[%c0_15, %c0_16], %15 {strides = array<i32>} : memref<16x128xf32, #tpu.memory_space<vmem>>, vector<16x128xf32>,
    } else {
    }
    %c0 = arith.constant 0 : index
    %c0_1 = arith.constant 0 : index
    %3 = vector.load %arg5[%c0, %c0_1] : memref<128x128xf32, #tpu.memory_space<vmem>>, vector<128x128xf32>
    %c0_2 = arith.constant 0 : index
    %c0_3 = arith.constant 0 : index
    %4 = vector.load %arg8[%c0_2, %c0_3] : memref<16x128xf32, #tpu.memory_space<vmem>>, vector<16x128xf32>
    %cst = arith.constant dense<0.000000e+00> : vector<16x128xf32>
    %5 = tpu.matmul %4, %3, %cst {dimension_numbers = #tpu.dot_dimension_numbers<[1], [0], [0], [1], [0, 0, 1, 1], [], []>} : vector<16x128xf32>, vector<128x128xf32>, vector<16x128xf32> -> vector<16x128xf32>
    %c0_4 = arith.constant 0 : index
    %c0_5 = arith.constant 0 : index
    %6 = vector.load %arg6[%c0_4, %c0_5] : memref<1x128xf32, #tpu.memory_space<vmem>>, vector<1x128xf32>
    %7 = vector.broadcast %6 : vector<1x128xf32> to vector<16x128xf32>
    %8 = arith.addf %5, %7 : vector<16x128xf32>
    %c0_6 = arith.constant 0 : index
    %c0_7 = arith.constant 0 : index
    %9 = vector.load %arg7[%c0_6, %c0_7] : memref<16x128xf32, #tpu.memory_space<vmem>>, vector<16x128xf32>
    tpu.vector_store %arg7[%c0_6, %c0_7], %8 {strides = array<i32>} : memref<16x128xf32, #tpu.memory_space<vmem>>, vector<16x128xf32>,
    return
  }
  func.func @transform_0(%arg0: i32, %arg1: i32) -> (i32, i32) {
    %c0_i32 = arith.constant 0 : i32
    %c0_i32_0 = arith.constant 0 : i32
    return %arg0, %c0_i32 : i32, i32
  }
  func.func @transform_1(%arg0: i32, %arg1: i32) -> (i32, i32) {
    %c0_i32 = arith.constant 0 : i32
    %c0_i32_0 = arith.constant 0 : i32
    %c0_i32_1 = arith.constant 0 : i32
    return %c0_i32, %c0_i32_0 : i32, i32
  }
  func.func @transform_2(%arg0: i32, %arg1: i32) -> (i32, i32) {
    %c0_i32 = arith.constant 0 : i32
    %c0_i32_0 = arith.constant 0 : i32
    %c0_i32_1 = arith.constant 0 : i32
    return %c0_i32, %c0_i32_0 : i32, i32
  }
  func.func @transform_3(%arg0: i32, %arg1: i32) -> (i32, i32) {
    %c0_i32 = arith.constant 0 : i32
    %c0_i32_0 = arith.constant 0 : i32
    return %c0_i32, %arg1 : i32, i32
  }
  func.func @transform_4(%arg0: i32, %arg1: i32) -> (i32, i32) {
    %c0_i32 = arith.constant 0 : i32
    %c0_i32_0 = arith.constant 0 : i32
    return %c0_i32, %arg1 : i32, i32
  }
  func.func @transform_5(%arg0: i32, %arg1: i32) -> (i32, i32) {
    %c0_i32 = arith.constant 0 : i32
    return %arg0, %arg1 : i32, i32
  }
}

</mosaic_0001>

<llo_original>
// kernel: tpu_custom_call.1
$region0: #{tpu_custom_call.1}
  #allocation0 [shape = 'u32[]', space=smem, size = 0x4, offset = 0x4, fixed_abs, tag = 'smem constant byte address 0x4 - core index']
  #allocation1 [shape = 'u32[72,128]{1,0:T(1,128)}', space=vmem, size = 0x9000, scoped, tag = 'internal scratch']
  #allocation2 [shape = 'f32[16,128]{1,0:T(8,128)}', space=vmem, size = 0x2000, scoped, tag = 'scratch operand']
  %s0 = inlined_call_operand.hbm [shape: f32[16,128], index: 0, kind: input, shape index: {}]
  %s1 = inlined_call_operand.hbm [shape: f32[128,128], index: 1, kind: input, shape index: {}]
  %s2 = inlined_call_operand.vmem [shape: f32[1,128], index: 2, kind: input, shape index: {}]
  %s3 = inlined_call_operand.hbm [shape: f32[128,128], index: 3, kind: input, shape index: {}]
  %s4 = inlined_call_operand.vmem [shape: f32[1,128], index: 4, kind: input, shape index: {}]
  %s5 = inlined_call_operand.hbm [shape: f32[16,128], index: 5, kind: output, shape index: {}]
  %s6 = sld [smem:[#allocation0]]
  $region46: #{tpu_custom_call.1} parent=0
    _
  %s8 = ssub.s32 1, %s6
  %s9 = scalar_select 0, %s8, %s6
  $region1: #{tpu_custom_call.1} parent=0
    #allocation3 [shape = 'u8[8192]{0}', space=vmem, size = 0x2000, scoped, tag = 'input window, operand 0, single buffered']
    #allocation4 [shape = 's32[1]{0}', space=sflag, size = 0x4, scoped, tag = 'scoped memory for tpu_custom_call.1']
    #allocation5 [shape = 's32[1]{0}', space=sflag, size = 0x4, scoped, tag = 'scoped memory for tpu_custom_call.1']
    #allocation6 [shape = 'u8[65536]{0}', space=vmem, size = 0x10000, scoped, tag = 'input window, operand 1, single buffered']
    #allocation7 [shape = 's32[1]{0}', space=sflag, size = 0x4, scoped, tag = 'scoped memory for tpu_custom_call.1']
    #allocation8 [shape = 'u8[65536]{0}', space=vmem, size = 0x10000, scoped, tag = 'input window, operand 3, single buffered']
    #allocation9 [shape = 'u8[8192]{0}', space=vmem, size = 0x2000, scoped, tag = 'output window, operand 0, single buffered']
    %10 = vsyncpa [#allocation4], 0
    %11 = vsyncpa [#allocation7], 0
    %12 = vsyncpa [#allocation5], 0
    // Predicated region
    $region2: #{tpu_custom_call.1} parent=1 // pred_check
      _
    $region3: #{tpu_custom_call.1} parent=1 // pred_check_branch
      %14 = sbr.rel (0) target = $region5
    $region4: #{tpu_custom_call.1} parent=1 // pred_region
      %16 = vsyncadd [#allocation4], 0
      %s17 = sshll.u32 %s0, 4
      %s18 = int_to_ptr.hbm [resolvable:$true] %s17
      %s19 = sshll.u32 [#allocation3], 4
      %s20 = int_to_ptr.vmem [resolvable:$true] %s19
      %25 = dma.hbm_to_vmem [thread:$0]  %s18, 256, %s20, [#allocation4], 128, 128, 8
    $region5: #{tpu_custom_call.1} parent=1 // pred_fallthru
      _
    // Predicated region
    $region6: #{tpu_custom_call.1} parent=1 // pred_check
      _
    $region7: #{tpu_custom_call.1} parent=1 // pred_check_branch
      %27 = sbr.rel (0) target = $region9
    $region8: #{tpu_custom_call.1} parent=1 // pred_region
      %29 = vsyncadd [#allocation7], 0
      %s30 = sshll.u32 %s1, 4
      %s31 = int_to_ptr.hbm [resolvable:$true] %s30
      %s32 = sshll.u32 [#allocation6], 4
      %s33 = int_to_ptr.vmem [resolvable:$true] %s32
      %38 = dma.hbm_to_vmem [thread:$0]  %s31, 2048, %s33, [#allocation7], 128, 128, 8
    $region9: #{tpu_custom_call.1} parent=1 // pred_fallthru
      _
    // Predicated region
    $region10: #{tpu_custom_call.1} parent=1 // pred_check
      _
    $region11: #{tpu_custom_call.1} parent=1 // pred_check_branch
      %40 = sbr.rel (0) target = $region13
    $region12: #{tpu_custom_call.1} parent=1 // pred_region
      _
    $region13: #{tpu_custom_call.1} parent=1 // pred_fallthru
      _
    // Predicated region
    $region14: #{tpu_custom_call.1} parent=1 // pred_check
      _
    $region15: #{tpu_custom_call.1} parent=1 // pred_check_branch
      %42 = sbr.rel (0) target = $region17
    $region16: #{tpu_custom_call.1} parent=1 // pred_region
      %44 = vsyncadd [#allocation7], 0
      %s45 = sshll.u32 %s3, 4
      %s46 = int_to_ptr.hbm [resolvable:$true] %s45
      %s47 = sshll.u32 [#allocation8], 4
      %s48 = int_to_ptr.vmem [resolvable:$true] %s47
      %53 = dma.hbm_to_vmem [thread:$0]  %s46, 2048, %s48, [#allocation7], 128, 128, 8
    $region17: #{tpu_custom_call.1} parent=1 // pred_fallthru
      _
    // Predicated region
    $region18: #{tpu_custom_call.1} parent=1 // pred_check
      _
    $region19: #{tpu_custom_call.1} parent=1 // pred_check_branch
      %55 = sbr.rel (0) target = $region21
    $region20: #{tpu_custom_call.1} parent=1 // pred_region
      _
    $region21: #{tpu_custom_call.1} parent=1 // pred_fallthru
      _
    // Predicated region
    $region22: #{tpu_custom_call.1} parent=1 // pred_check
      _
    $region23: #{tpu_custom_call.1} parent=1 // pred_check_branch
      %57 = sbr.rel (0) target = $region25
    $region24: #{tpu_custom_call.1} parent=1 // pred_region
      %59 = dma.done [#allocation4], 256
    $region25: #{tpu_custom_call.1} parent=1 // pred_fallthru
      _
    // Predicated region
    $region26: #{tpu_custom_call.1} parent=1 // pred_check
      _
    $region27: #{tpu_custom_call.1} parent=1 // pred_check_branch
      %61 = sbr.rel (0) target = $region29
    $region28: #{tpu_custom_call.1} parent=1 // pred_region
      %63 = dma.done [#allocation7], 2048
    $region29: #{tpu_custom_call.1} parent=1 // pred_fallthru
      _
    // Predicated region
    $region30: #{tpu_custom_call.1} parent=1 // pred_check
      _
    $region31: #{tpu_custom_call.1} parent=1 // pred_check_branch
      %65 = sbr.rel (0) target = $region33
    $region32: #{tpu_custom_call.1} parent=1 // pred_region
      %67 = dma.done [#allocation7], 2048
    $region33: #{tpu_custom_call.1} parent=1 // pred_fallthru
      _
    %p68 = scmp.eq.s32.totalorder 0, 0
    // Predicated region
    $region34: #{tpu_custom_call.1} parent=1 // pred_check
      %p69 = pneg %p68
    $region35: #{tpu_custom_call.1} parent=1 // pred_check_branch
      %71 = sbr.rel (%p69) target = $region37
    $region36: #{tpu_custom_call.1} parent=1 // pred_region
      %v72 = vld [vmem:[#allocation3] sm:$0xff]
      %v73 = vld [vmem:[#allocation3 + $0x8] sm:$0xff]
      %v74 = vld [vmem:[#allocation6] sm:$0xff]
      %v75 = vld [vmem:[#allocation6 + $0x8] sm:$0xff]
      %v76 = vld [vmem:[#allocation6 + $0x10] sm:$0xff]
      %v77 = vld [vmem:[#allocation6 + $0x18] sm:$0xff]
      %v78 = vld [vmem:[#allocation6 + $0x20] sm:$0xff]
      %v79 = vld [vmem:[#allocation6 + $0x28] sm:$0xff]
      %v80 = vld [vmem:[#allocation6 + $0x30] sm:$0xff]
      %v81 = vld [vmem:[#allocation6 + $0x38] sm:$0xff]
      %v82 = vld [vmem:[#allocation6 + $0x40] sm:$0xff]
      %v83 = vld [vmem:[#allocation6 + $0x48] sm:$0xff]
      %v84 = vld [vmem:[#allocation6 + $0x50] sm:$0xff]
      %v85 = vld [vmem:[#allocation6 + $0x58] sm:$0xff]
      %v86 = vld [vmem:[#allocation6 + $0x60] sm:$0xff]
      %v87 = vld [vmem:[#allocation6 + $0x68] sm:$0xff]
      %v88 = vld [vmem:[#allocation6 + $0x70] sm:$0xff]
      %v89 = vld [vmem:[#allocation6 + $0x78] sm:$0xff]
      %v90 = vld [vmem:[%s2] sm:$0x1]
      %v92 = vperm.slane %v90, 0
      %94 = vmatpush.msra.mxu0 %v89
      %95 = vmatpush.msra.mxu0 %v88
      %96 = vmatpush.msra.mxu0 %v87
      %97 = vmatpush.msra.mxu0 %v86
      %98 = vmatpush.msra.mxu0 %v85
      %99 = vmatpush.msra.mxu0 %v84
      %100 = vmatpush.msra.mxu0 %v83
      %101 = vmatpush.msra.mxu0 %v82
      %102 = vmatpush.msra.mxu0 %v81
      %103 = vmatpush.msra.mxu0 %v80
      %104 = vmatpush.msra.mxu0 %v79
      %105 = vmatpush.msra.mxu0 %v78
      %106 = vmatpush.msra.mxu0 %v77
      %107 = vmatpush.msra.mxu0 %v76
      %108 = vmatpush.msra.mxu0 %v75
      %109 = vmatpush.msra.mxu0 %v74
      %110 = vmatmul.f32.gmra.mxu0 %v72
      %v111 = vpop.f32.mrf.mxu0
      %v112 = vadd.f32 %v92, %v111
      %113 = vmatmul.f32.gmra.mxu0 %v73
      %v114 = vpop.f32.mrf.mxu0
      %v115 = vadd.f32 %v92, %v114
      %116 = vdwg.mxu0
      %117 = vst [vmem:[#allocation2] sm:$0xff] %v112
      %118 = vst [vmem:[#allocation2 + $0x8] sm:$0xff] %v115
    $region37: #{tpu_custom_call.1} parent=1 // pred_fallthru
      _
    %v119 = vld [vmem:[#allocation8] sm:$0xff]
    %v120 = vld [vmem:[#allocation8 + $0x8] sm:$0xff]
    %v121 = vld [vmem:[#allocation8 + $0x10] sm:$0xff]
    %v122 = vld [vmem:[#allocation8 + $0x18] sm:$0xff]
    %v123 = vld [vmem:[#allocation8 + $0x20] sm:$0xff]
    %v124 = vld [vmem:[#allocation8 + $0x28] sm:$0xff]
    %v125 = vld [vmem:[#allocation8 + $0x30] sm:$0xff]
    %v126 = vld [vmem:[#allocation8 + $0x38] sm:$0xff]
    %v127 = vld [vmem:[#allocation8 + $0x40] sm:$0xff]
    %v128 = vld [vmem:[#allocation8 + $0x48] sm:$0xff]
    %v129 = vld [vmem:[#allocation8 + $0x50] sm:$0xff]
    %v130 = vld [vmem:[#allocation8 + $0x58] sm:$0xff]
    %v131 = vld [vmem:[#allocation8 + $0x60] sm:$0xff]
    %v132 = vld [vmem:[#allocation8 + $0x68] sm:$0xff]
    %v133 = vld [vmem:[#allocation8 + $0x70] sm:$0xff]
    %v134 = vld [vmem:[#allocation8 + $0x78] sm:$0xff]
    %v135 = vld [vmem:[#allocation2] sm:$0xff]
    %v136 = vld [vmem:[#allocation2 + $0x8] sm:$0xff]
    %v137 = vld [vmem:[%s4] sm:$0x1]
    %v139 = vperm.slane %v137, 0
    %141 = vmatpush.msra.mxu0 %v134
    %142 = vmatpush.msra.mxu0 %v133
    %143 = vmatpush.msra.mxu0 %v132
    %144 = vmatpush.msra.mxu0 %v131
    %145 = vmatpush.msra.mxu0 %v130
    %146 = vmatpush.msra.mxu0 %v129
    %147 = vmatpush.msra.mxu0 %v128
    %148 = vmatpush.msra.mxu0 %v127
    %149 = vmatpush.msra.mxu0 %v126
    %150 = vmatpush.msra.mxu0 %v125
    %151 = vmatpush.msra.mxu0 %v124
    %152 = vmatpush.msra.mxu0 %v123
    %153 = vmatpush.msra.mxu0 %v122
    %154 = vmatpush.msra.mxu0 %v121
    %155 = vmatpush.msra.mxu0 %v120
    %156 = vmatpush.msra.mxu0 %v119
    %157 = vmatmul.f32.gmra.mxu0 %v135
    %v158 = vpop.f32.mrf.mxu0
    %v159 = vadd.f32 %v139, %v158
    %160 = vmatmul.f32.gmra.mxu0 %v136
    %v161 = vpop.f32.mrf.mxu0
    %v162 = vadd.f32 %v139, %v161
    %163 = vdwg.mxu0
    %164 = vst [vmem:[#allocation9] sm:$0xff] %v159
    %165 = vst [vmem:[#allocation9 + $0x8] sm:$0xff] %v162
    // Predicated region
    $region38: #{tpu_custom_call.1} parent=1 // pred_check
      _
    $region39: #{tpu_custom_call.1} parent=1 // pred_check_branch
      %167 = sbr.rel (0) target = $region41
    $region40: #{tpu_custom_call.1} parent=1 // pred_region
      %169 = vsyncadd [#allocation5], 0
      %s170 = sshll.u32 [#allocation9], 4
      %s171 = int_to_ptr.vmem [resolvable:$true] %s170
      %s172 = sshll.u32 %s5, 4
      %s173 = int_to_ptr.hbm [resolvable:$true] %s172
      %178 = dma.vmem_to_hbm [thread:$0]  %s171, 256, %s173, [#allocation5], 128, 128, 8
    $region41: #{tpu_custom_call.1} parent=1 // pred_fallthru
      _
    // Predicated region
    $region42: #{tpu_custom_call.1} parent=1 // pred_check
      _
    $region43: #{tpu_custom_call.1} parent=1 // pred_check_branch
      %180 = sbr.rel (0) target = $region45
    $region44: #{tpu_custom_call.1} parent=1 // pred_region
      %182 = dma.done [#allocation5], 256
    $region45: #{tpu_custom_call.1} parent=1 // pred_fallthru
      _
    %183 = vsyncpa [#allocation4], 1
    %184 = vsyncpa [#allocation7], 1
    %185 = vsyncpa [#allocation5], 1

// kernel: tpu_custom_call.1
$region0: #{tpu_custom_call.1}
  #allocation0 [shape = 'u32[]', space=smem, size = 0x4, offset = 0x4, fixed_abs, tag = 'smem constant byte address 0x4 - core index']
  #allocation1 [shape = 'u32[72,128]{1,0:T(1,128)}', space=vmem, size = 0x9000, scoped, tag = 'internal scratch']
  #allocation2 [shape = 'f32[16,128]{1,0:T(8,128)}', space=vmem, size = 0x2000, scoped, tag = 'scratch operand']
  %s0 = inlined_call_operand.hbm [shape: f32[16,128], index: 0, kind: input, shape index: {}]
  %s1 = inlined_call_operand.hbm [shape: f32[128,128], index: 1, kind: input, shape index: {}]
  %s2 = inlined_call_operand.vmem [shape: f32[1,128], index: 2, kind: input, shape index: {}]
  %s3 = inlined_call_operand.hbm [shape: f32[128,128], index: 3, kind: input, shape index: {}]
  %s4 = inlined_call_operand.vmem [shape: f32[1,128], index: 4, kind: input, shape index: {}]
  %s5 = inlined_call_operand.hbm [shape: f32[16,128], index: 5, kind: output, shape index: {}]
  %s6 = sld [smem:[#allocation0]]
  $region46: #{tpu_custom_call.1} parent=0
    _
  %s8 = ssub.s32 1, %s6
  %s9 = scalar_select 0, %s8, %s6
  $region1: #{tpu_custom_call.1} parent=0
    #allocation3 [shape = 'u8[8192]{0}', space=vmem, size = 0x2000, scoped, tag = 'input window, operand 0, single buffered']
    #allocation4 [shape = 's32[1]{0}', space=sflag, size = 0x4, scoped, tag = 'scoped memory for tpu_custom_call.1']
    #allocation5 [shape = 's32[1]{0}', space=sflag, size = 0x4, scoped, tag = 'scoped memory for tpu_custom_call.1']
    #allocation6 [shape = 'u8[65536]{0}', space=vmem, size = 0x10000, scoped, tag = 'input window, operand 1, single buffered']
    #allocation7 [shape = 's32[1]{0}', space=sflag, size = 0x4, scoped, tag = 'scoped memory for tpu_custom_call.1']
    #allocation8 [shape = 'u8[65536]{0}', space=vmem, size = 0x10000, scoped, tag = 'input window, operand 3, single buffered']
    #allocation9 [shape = 'u8[8192]{0}', space=vmem, size = 0x2000, scoped, tag = 'output window, operand 0, single buffered']
    %10 = vsyncpa [#allocation4], 0
    %11 = vsyncpa [#allocation7], 0
    %12 = vsyncpa [#allocation5], 0
    // Predicated region
    $region2: #{tpu_custom_call.1} parent=1 // pred_check
      _
    $region3: #{tpu_custom_call.1} parent=1 // pred_check_branch
      %14 = sbr.rel (0) target = $region5
    $region4: #{tpu_custom_call.1} parent=1 // pred_region
      %16 = vsyncadd [#allocation4], 0
      %s17 = sshll.u32 %s0, 4
      %s18 = int_to_ptr.hbm [resolvable:$true] %s17
      %s19 = sshll.u32 [#allocation3], 4
      %s20 = int_to_ptr.vmem [resolvable:$true] %s19
      %25 = dma.hbm_to_vmem [thread:$0]  %s18, 256, %s20, [#allocation4], 128, 128, 8
    $region5: #{tpu_custom_call.1} parent=1 // pred_fallthru
      _
    // Predicated region
    $region6: #{tpu_custom_call.1} parent=1 // pred_check
      _
    $region7: #{tpu_custom_call.1} parent=1 // pred_check_branch
      %27 = sbr.rel (0) target = $region9
    $region8: #{tpu_custom_call.1} parent=1 // pred_region
      %29 = vsyncadd [#allocation7], 0
      %s30 = sshll.u32 %s1, 4
      %s31 = int_to_ptr.hbm [resolvable:$true] %s30
      %s32 = sshll.u32 [#allocation6], 4
      %s33 = int_to_ptr.vmem [resolvable:$true] %s32
      %38 = dma.hbm_to_vmem [thread:$0]  %s31, 2048, %s33, [#allocation7], 128, 128, 8
    $region9: #{tpu_custom_call.1} parent=1 // pred_fallthru
      _
    // Predicated region
    $region10: #{tpu_custom_call.1} parent=1 // pred_check
      _
    $region11: #{tpu_custom_call.1} parent=1 // pred_check_branch
      %40 = sbr.rel (0) target = $region13
    $region12: #{tpu_custom_call.1} parent=1 // pred_region
      _
    $region13: #{tpu_custom_call.1} parent=1 // pred_fallthru
      _
    // Predicated region
    $region14: #{tpu_custom_call.1} parent=1 // pred_check
      _
    $region15: #{tpu_custom_call.1} parent=1 // pred_check_branch
      %42 = sbr.rel (0) target = $region17
    $region16: #{tpu_custom_call.1} parent=1 // pred_region
      %44 = vsyncadd [#allocation7], 0
      %s45 = sshll.u32 %s3, 4
      %s46 = int_to_ptr.hbm [resolvable:$true] %s45
      %s47 = sshll.u32 [#allocation8], 4
      %s48 = int_to_ptr.vmem [resolvable:$true] %s47
      %53 = dma.hbm_to_vmem [thread:$0]  %s46, 2048, %s48, [#allocation7], 128, 128, 8
    $region17: #{tpu_custom_call.1} parent=1 // pred_fallthru
      _
    // Predicated region
    $region18: #{tpu_custom_call.1} parent=1 // pred_check
      _
    $region19: #{tpu_custom_call.1} parent=1 // pred_check_branch
      %55 = sbr.rel (0) target = $region21
    $region20: #{tpu_custom_call.1} parent=1 // pred_region
      _
    $region21: #{tpu_custom_call.1} parent=1 // pred_fallthru
      _
    // Predicated region
    $region22: #{tpu_custom_call.1} parent=1 // pred_check
      _
    $region23: #{tpu_custom_call.1} parent=1 // pred_check_branch
      %57 = sbr.rel (0) target = $region25
    $region24: #{tpu_custom_call.1} parent=1 // pred_region
      %59 = dma.done [#allocation4], 256
    $region25: #{tpu_custom_call.1} parent=1 // pred_fallthru
      _
    // Predicated region
    $region26: #{tpu_custom_call.1} parent=1 // pred_check
      _
    $region27: #{tpu_custom_call.1} parent=1 // pred_check_branch
      %61 = sbr.rel (0) target = $region29
    $region28: #{tpu_custom_call.1} parent=1 // pred_region
      %63 = dma.done [#allocation7], 2048
    $region29: #{tpu_custom_call.1} parent=1 // pred_fallthru
      _
    // Predicated region
    $region30: #{tpu_custom_call.1} parent=1 // pred_check
      _
    $region31: #{tpu_custom_call.1} parent=1 // pred_check_branch
      %65 = sbr.rel (0) target = $region33
    $region32: #{tpu_custom_call.1} parent=1 // pred_region
      %67 = dma.done [#allocation7], 2048
    $region33: #{tpu_custom_call.1} parent=1 // pred_fallthru
      _
    %p68 = scmp.eq.s32.totalorder 0, 0
    // Predicated region
    $region34: #{tpu_custom_call.1} parent=1 // pred_check
      %p69 = pneg %p68
    $region35: #{tpu_custom_call.1} parent=1 // pred_check_branch
      %71 = sbr.rel (%p69) target = $region37
    $region36: #{tpu_custom_call.1} parent=1 // pred_region
      %v72 = vld [vmem:[#allocation3] sm:$0xff]
      %v73 = vld [vmem:[#allocation3 + $0x8] sm:$0xff]
      %v74 = vld [vmem:[#allocation6] sm:$0xff]
      %v75 = vld [vmem:[#allocation6 + $0x8] sm:$0xff]
      %v76 = vld [vmem:[#allocation6 + $0x10] sm:$0xff]
      %v77 = vld [vmem:[#allocation6 + $0x18] sm:$0xff]
      %v78 = vld [vmem:[#allocation6 + $0x20] sm:$0xff]
      %v79 = vld [vmem:[#allocation6 + $0x28] sm:$0xff]
      %v80 = vld [vmem:[#allocation6 + $0x30] sm:$0xff]
      %v81 = vld [vmem:[#allocation6 + $0x38] sm:$0xff]
      %v82 = vld [vmem:[#allocation6 + $0x40] sm:$0xff]
      %v83 = vld [vmem:[#allocation6 + $0x48] sm:$0xff]
      %v84 = vld [vmem:[#allocation6 + $0x50] sm:$0xff]
      %v85 = vld [vmem:[#allocation6 + $0x58] sm:$0xff]
      %v86 = vld [vmem:[#allocation6 + $0x60] sm:$0xff]
      %v87 = vld [vmem:[#allocation6 + $0x68] sm:$0xff]
      %v88 = vld [vmem:[#allocation6 + $0x70] sm:$0xff]
      %v89 = vld [vmem:[#allocation6 + $0x78] sm:$0xff]
      %v90 = vld [vmem:[%s2] sm:$0x1]
      %v92 = vperm.slane %v90, 0
      %94 = vmatpush.msra.mxu0 %v89
      %95 = vmatpush.msra.mxu0 %v88
      %96 = vmatpush.msra.mxu0 %v87
      %97 = vmatpush.msra.mxu0 %v86
      %98 = vmatpush.msra.mxu0 %v85
      %99 = vmatpush.msra.mxu0 %v84
      %100 = vmatpush.msra.mxu0 %v83
      %101 = vmatpush.msra.mxu0 %v82
      %102 = vmatpush.msra.mxu0 %v81
      %103 = vmatpush.msra.mxu0 %v80
      %104 = vmatpush.msra.mxu0 %v79
      %105 = vmatpush.msra.mxu0 %v78
      %106 = vmatpush.msra.mxu0 %v77
      %107 = vmatpush.msra.mxu0 %v76
      %108 = vmatpush.msra.mxu0 %v75
      %109 = vmatpush.msra.mxu0 %v74
      %110 = vmatmul.f32.gmra.mxu0 %v72
      %v111 = vpop.f32.mrf.mxu0
      %v112 = vadd.f32 %v92, %v111
      %113 = vmatmul.f32.gmra.mxu0 %v73
      %v114 = vpop.f32.mrf.mxu0
      %v115 = vadd.f32 %v92, %v114
      %116 = vdwg.mxu0
      %117 = vst [vmem:[#allocation2] sm:$0xff] %v112
      %118 = vst [vmem:[#allocation2 + $0x8] sm:$0xff] %v115
    $region37: #{tpu_custom_call.1} parent=1 // pred_fallthru
      _
    %v119 = vld [vmem:[#allocation8] sm:$0xff]
    %v120 = vld [vmem:[#allocation8 + $0x8] sm:$0xff]
    %v121 = vld [vmem:[#allocation8 + $0x10] sm:$0xff]
    %v122 = vld [vmem:[#allocation8 + $0x18] sm:$0xff]
    %v123 = vld [vmem:[#allocation8 + $0x20] sm:$0xff]
    %v124 = vld [vmem:[#allocation8 + $0x28] sm:$0xff]
    %v125 = vld [vmem:[#allocation8 + $0x30] sm:$0xff]
    %v126 = vld [vmem:[#allocation8 + $0x38] sm:$0xff]
    %v127 = vld [vmem:[#allocation8 + $0x40] sm:$0xff]
    %v128 = vld [vmem:[#allocation8 + $0x48] sm:$0xff]
    %v129 = vld [vmem:[#allocation8 + $0x50] sm:$0xff]
    %v130 = vld [vmem:[#allocation8 + $0x58] sm:$0xff]
    %v131 = vld [vmem:[#allocation8 + $0x60] sm:$0xff]
    %v132 = vld [vmem:[#allocation8 + $0x68] sm:$0xff]
    %v133 = vld [vmem:[#allocation8 + $0x70] sm:$0xff]
    %v134 = vld [vmem:[#allocation8 + $0x78] sm:$0xff]
    %v135 = vld [vmem:[#allocation2] sm:$0xff]
    %v136 = vld [vmem:[#allocation2 + $0x8] sm:$0xff]
    %v137 = vld [vmem:[%s4] sm:$0x1]
    %v139 = vperm.slane %v137, 0
    %141 = vmatpush.msra.mxu0 %v134
    %142 = vmatpush.msra.mxu0 %v133
    %143 = vmatpush.msra.mxu0 %v132
    %144 = vmatpush.msra.mxu0 %v131
    %145 = vmatpush.msra.mxu0 %v130
    %146 = vmatpush.msra.mxu0 %v129
    %147 = vmatpush.msra.mxu0 %v128
    %148 = vmatpush.msra.mxu0 %v127
    %149 = vmatpush.msra.mxu0 %v126
    %150 = vmatpush.msra.mxu0 %v125
    %151 = vmatpush.msra.mxu0 %v124
    %152 = vmatpush.msra.mxu0 %v123
    %153 = vmatpush.msra.mxu0 %v122
    %154 = vmatpush.msra.mxu0 %v121
    %155 = vmatpush.msra.mxu0 %v120
    %156 = vmatpush.msra.mxu0 %v119
    %157 = vmatmul.f32.gmra.mxu0 %v135
    %v158 = vpop.f32.mrf.mxu0
    %v159 = vadd.f32 %v139, %v158
    %160 = vmatmul.f32.gmra.mxu0 %v136
    %v161 = vpop.f32.mrf.mxu0
    %v162 = vadd.f32 %v139, %v161
    %163 = vdwg.mxu0
    %164 = vst [vmem:[#allocation9] sm:$0xff] %v159
    %165 = vst [vmem:[#allocation9 + $0x8] sm:$0xff] %v162
    // Predicated region
    $region38: #{tpu_custom_call.1} parent=1 // pred_check
      _
    $region39: #{tpu_custom_call.1} parent=1 // pred_check_branch
      %167 = sbr.rel (0) target = $region41
    $region40: #{tpu_custom_call.1} parent=1 // pred_region
      %169 = vsyncadd [#allocation5], 0
      %s170 = sshll.u32 [#allocation9], 4
      %s171 = int_to_ptr.vmem [resolvable:$true] %s170
      %s172 = sshll.u32 %s5, 4
      %s173 = int_to_ptr.hbm [resolvable:$true] %s172
      %178 = dma.vmem_to_hbm [thread:$0]  %s171, 256, %s173, [#allocation5], 128, 128, 8
    $region41: #{tpu_custom_call.1} parent=1 // pred_fallthru
      _
    // Predicated region
    $region42: #{tpu_custom_call.1} parent=1 // pred_check
      _
    $region43: #{tpu_custom_call.1} parent=1 // pred_check_branch
      %180 = sbr.rel (0) target = $region45
    $region44: #{tpu_custom_call.1} parent=1 // pred_region
      %182 = dma.done [#allocation5], 256
    $region45: #{tpu_custom_call.1} parent=1 // pred_fallthru
      _
    %183 = vsyncpa [#allocation4], 1
    %184 = vsyncpa [#allocation7], 1
    %185 = vsyncpa [#allocation5], 1

</llo_original>
